<compile_context>
chip_gen: v6e
topology: v6e:2x2x1
jax: 0.10.0
libtpu: 0.0.40
codegen_flags: <defaults>
</compile_context>

<pallas_src>
import functools

import jax
import jax.numpy as jnp
from jax.experimental import pallas as pl
from jax.experimental.pallas import tpu as pltpu

BN_EPS = 1e-5


def linear_bn_relu_kernel(x_ref, w_ref, gamma_ref, beta_ref, o_ref):
    # Linear (bias dropped -- it cancels under BN centering): y = x @ W
    y = jnp.dot(x_ref[...], w_ref[...], preferred_element_type=jnp.float32)

    # BatchNorm1d, training semantics: per-feature batch mean + biased variance
    # over the (fully resident) batch axis, then gamma/beta affine.
    mean = jnp.mean(y, axis=0, keepdims=True)          # XLU reduction
    centered = y - mean
    var = jnp.mean(centered * centered, axis=0, keepdims=True)
    inv_std = jax.lax.rsqrt(var + BN_EPS)              # EUP (free slot)
    out = centered * inv_std * gamma_ref[...] + beta_ref[...]

    # ReLU
    o_ref[...] = jnp.maximum(out, 0.0).astype(o_ref.dtype)


@functools.partial(jax.jit, static_argnames=("tn",))
def linear_with_batch_relu(x, w, b, gamma, beta, *, tn=128):
    """Forward pass of LinearwithBatchRelu.

    x:     (B, Cin)  f32
    w:     (Cout, Cin) f32   (PyTorch nn.Linear weight layout)
    b:     (Cout,)   f32     (unused inside the kernel: exactly cancelled by
                              training-mode BN centering; kept for API parity)
    gamma: (Cout,)   f32     (BatchNorm1d weight)
    beta:  (Cout,)   f32     (BatchNorm1d bias)
    Returns (B, Cout) f32.
    """
    del b  # mathematically exact: BN subtracts the per-feature mean, removing b.

    B, Cin = x.shape
    Cout = w.shape[0]

    # Lane-dense output: pad Cout up to a multiple of tn (tn is a multiple of 128).
    # For larger layers, pick tn as the largest multiple of 128 whose
    # double-buffered (Cin, tn) weight tile fits in ~half the scoped VMEM limit
    # (64 MiB physical on v7x, 128 MiB on v5e/v6e).
    assert tn % 128 == 0, "tn must be a multiple of 128 for lane-dense stores"
    cout_p = ((Cout + tn - 1) // tn) * tn
    pad = cout_p - Cout

    w_t = jnp.transpose(w)                     # (Cin, Cout) so the kernel does x @ W
    gamma2 = gamma.reshape(1, Cout)
    beta2 = beta.reshape(1, Cout)
    if pad:
        w_t = jnp.pad(w_t, ((0, 0), (0, pad)))          # zero cols -> y = 0
        gamma2 = jnp.pad(gamma2, ((0, 0), (0, pad)))    # value irrelevant (y_hat = 0)
        beta2 = jnp.pad(beta2, ((0, 0), (0, pad)))      # 0 -> padded output = 0

    grid = (cout_p // tn,)

    out_p = pl.pallas_call(
        linear_bn_relu_kernel,
        out_shape=jax.ShapeDtypeStruct((B, cout_p), jnp.float32),
        grid_spec=pltpu.PrefetchScalarGridSpec(
            num_scalar_prefetch=0,
            grid=grid,
            in_specs=[
                pl.BlockSpec((B, Cin), lambda j: (0, 0)),    # x: replicated per tile
                pl.BlockSpec((Cin, tn), lambda j: (0, j)),   # weight: streamed over Cout
                pl.BlockSpec((1, tn), lambda j: (0, j)),     # gamma
                pl.BlockSpec((1, tn), lambda j: (0, j)),     # beta
            ],
            out_specs=pl.BlockSpec((B, tn), lambda j: (0, j)),
        ),
        compiler_params=pltpu.CompilerParams(
            # Cout tiles are independent (per-feature BN stats) -> megacore-parallel.
            dimension_semantics=("parallel",),
        ),
    )(x, w_t, gamma2, beta2)

    return out_p[:, :Cout]


if __name__ == "__main__":
    # Small shapes consistent with the module, e.g. LinearwithBatchRelu(32, 64).
    B, Cin, Cout = 8, 32, 64

    key = jax.random.PRNGKey(0)
    kx, kw, kb = jax.random.split(key, 3)

    x = jax.random.normal(kx, (B, Cin), dtype=jnp.float32)

    # Deterministic parameter init (synthetic; mimics PyTorch-style uniform ranges).
    bound = 1.0 / jnp.sqrt(jnp.float32(Cin))
    w = jax.random.uniform(kw, (Cout, Cin), minval=-bound, maxval=bound, dtype=jnp.float32)
    b = jax.random.uniform(kb, (Cout,), minval=-bound, maxval=bound, dtype=jnp.float32)
    gamma = jnp.ones((Cout,), dtype=jnp.float32)   # BatchNorm1d weight init
    beta = jnp.zeros((Cout,), dtype=jnp.float32)   # BatchNorm1d bias init

    out = linear_with_batch_relu(x, w, b, gamma, beta)
    jax.block_until_ready(out)

    # Pure-JAX reference (training-mode BatchNorm1d semantics, bias included).
    # TODO(synk): BatchNorm1d running_mean/running_var buffer updates (a training
    # side effect) are not reproduced; they do not affect the forward output.
    y_ref = x @ w.T + b
    mean = jnp.mean(y_ref, axis=0, keepdims=True)
    var = jnp.mean((y_ref - mean) ** 2, axis=0, keepdims=True)
    ref = jnp.maximum((y_ref - mean) / jnp.sqrt(var + BN_EPS) * gamma + beta, 0.0)
    assert out.shape == (B, Cout)
    assert jnp.allclose(out, ref, atol=1e-4, rtol=1e-4), "mismatch vs reference"

    print("KERNEL_OK")
</pallas_src>

<mosaic_0001>
module attributes {stable_mosaic.version = 11 : i64} {
  func.func @linear_bn_relu_kernel(%arg0: i32, %arg1: memref<8x32xf32, #tpu.memory_space<vmem>>, %arg2: memref<32x128xf32, #tpu.memory_space<vmem>>, %arg3: memref<1x128xf32, #tpu.memory_space<vmem>>, %arg4: memref<1x128xf32, #tpu.memory_space<vmem>>, %arg5: memref<8x128xf32, #tpu.memory_space<vmem>>) attributes {dimension_semantics = [#tpu.dimension_semantics<parallel>], iteration_bounds = array<i64: 1>, scalar_prefetch = 0 : i64, scratch_operands = 0 : i64, tpu.core_type = #tpu.core_type<tc>, window_params = [{pipeline_mode = #tpu.pipeline_mode<synchronous>, transform_indices = @transform_0, window_bounds = array<i64: 8, 32>}, {transform_indices = @transform_1, window_bounds = array<i64: 32, 128>}, {transform_indices = @transform_2, window_bounds = array<i64: 1, 128>}, {transform_indices = @transform_3, window_bounds = array<i64: 1, 128>}, {transform_indices = @transform_4, window_bounds = array<i64: 8, 128>}]} {
    %c0 = arith.constant 0 : index
    %c0_0 = arith.constant 0 : index
    %0 = vector.load %arg1[%c0, %c0_0] : memref<8x32xf32, #tpu.memory_space<vmem>>, vector<8x32xf32>
    %c0_1 = arith.constant 0 : index
    %c0_2 = arith.constant 0 : index
    %1 = vector.load %arg2[%c0_1, %c0_2] : memref<32x128xf32, #tpu.memory_space<vmem>>, vector<32x128xf32>
    %cst = arith.constant dense<0.000000e+00> : vector<8x128xf32>
    %2 = tpu.matmul %0, %1, %cst {dimension_numbers = #tpu.dot_dimension_numbers<[1], [0], [0], [1], [0, 0, 1, 1], [], []>} : vector<8x32xf32>, vector<32x128xf32>, vector<8x128xf32> -> vector<8x128xf32>
    %cst_3 = arith.constant dense<0.000000e+00> : vector<128xf32>
    %3 = vector.multi_reduction <add>, %2, %cst_3 [0] : vector<8x128xf32> to vector<128xf32>
    %4 = vector.shape_cast %3 : vector<128xf32> to vector<1x128xf32>
    %cst_4 = arith.constant 8.000000e+00 : f32
    %5 = vector.broadcast %cst_4 : f32 to vector<1x128xf32>
    %6 = arith.divf %4, %5 : vector<1x128xf32>
    %7 = vector.broadcast %6 : vector<1x128xf32> to vector<8x128xf32>
    %8 = arith.subf %2, %7 : vector<8x128xf32>
    %9 = arith.mulf %8, %8 : vector<8x128xf32>
    %cst_5 = arith.constant dense<0.000000e+00> : vector<128xf32>
    %10 = vector.multi_reduction <add>, %9, %cst_5 [0] : vector<8x128xf32> to vector<128xf32>
    %11 = vector.shape_cast %10 : vector<128xf32> to vector<1x128xf32>
    %cst_6 = arith.constant 8.000000e+00 : f32
    %12 = vector.broadcast %cst_6 : f32 to vector<1x128xf32>
    %13 = arith.divf %11, %12 : vector<1x128xf32>
    %cst_7 = arith.constant 9.99999974E-6 : f32
    %14 = vector.broadcast %cst_7 : f32 to vector<1x128xf32>
    %15 = arith.addf %13, %14 : vector<1x128xf32>
    %16 = math.rsqrt %15 : vector<1x128xf32>
    %17 = vector.broadcast %16 : vector<1x128xf32> to vector<8x128xf32>
    %18 = arith.mulf %8, %17 : vector<8x128xf32>
    %c0_8 = arith.constant 0 : index
    %c0_9 = arith.constant 0 : index
    %19 = vector.load %arg3[%c0_8, %c0_9] : memref<1x128xf32, #tpu.memory_space<vmem>>, vector<1x128xf32>
    %20 = vector.broadcast %19 : vector<1x128xf32> to vector<8x128xf32>
    %21 = arith.mulf %18, %20 : vector<8x128xf32>
    %c0_10 = arith.constant 0 : index
    %c0_11 = arith.constant 0 : index
    %22 = vector.load %arg4[%c0_10, %c0_11] : memref<1x128xf32, #tpu.memory_space<vmem>>, vector<1x128xf32>
    %23 = vector.broadcast %22 : vector<1x128xf32> to vector<8x128xf32>
    %24 = arith.addf %21, %23 : vector<8x128xf32>
    %cst_12 = arith.constant 0.000000e+00 : f32
    %25 = vector.broadcast %cst_12 : f32 to vector<8x128xf32>
    %26 = arith.maximumf %24, %25 : vector<8x128xf32>
    %c0_13 = arith.constant 0 : index
    %c0_14 = arith.constant 0 : index
    %27 = vector.load %arg5[%c0_13, %c0_14] : memref<8x128xf32, #tpu.memory_space<vmem>>, vector<8x128xf32>
    tpu.vector_store %arg5[%c0_13, %c0_14], %26 {strides = array<i32>} : memref<8x128xf32, #tpu.memory_space<vmem>>, vector<8x128xf32>,
    return
  }
  func.func @transform_0(%arg0: i32) -> (i32, i32) {
    %c0_i32 = arith.constant 0 : i32
    %c0_i32_0 = arith.constant 0 : i32
    %c0_i32_1 = arith.constant 0 : i32
    return %c0_i32, %c0_i32_0 : i32, i32
  }
  func.func @transform_1(%arg0: i32) -> (i32, i32) {
    %c0_i32 = arith.constant 0 : i32
    %c0_i32_0 = arith.constant 0 : i32
    return %c0_i32, %arg0 : i32, i32
  }
  func.func @transform_2(%arg0: i32) -> (i32, i32) {
    %c0_i32 = arith.constant 0 : i32
    %c0_i32_0 = arith.constant 0 : i32
    return %c0_i32, %arg0 : i32, i32
  }
  func.func @transform_3(%arg0: i32) -> (i32, i32) {
    %c0_i32 = arith.constant 0 : i32
    %c0_i32_0 = arith.constant 0 : i32
    return %c0_i32, %arg0 : i32, i32
  }
  func.func @transform_4(%arg0: i32) -> (i32, i32) {
    %c0_i32 = arith.constant 0 : i32
    %c0_i32_0 = arith.constant 0 : i32
    return %c0_i32, %arg0 : i32, i32
  }
}

</mosaic_0001>

<llo_original>
// kernel: linear_with_batch_relu.1
$region0: #{linear_with_batch_relu.1}
  #allocation0 [shape = 'u32[]', space=smem, size = 0x4, offset = 0x4, fixed_abs, tag = 'smem constant byte address 0x4 - core index']
  #allocation1 [shape = 'u32[144,128]{1,0:T(1,128)}', space=vmem, size = 0x12000, scoped, tag = 'internal scratch']
  %s0 = inlined_call_operand.vmem [shape: f32[8,32], index: 0, kind: input, shape index: {}]
  %s1 = inlined_call_operand.vmem [shape: f32[32,128], index: 1, kind: input, shape index: {}]
  %s2 = inlined_call_operand.vmem [shape: f32[1,128], index: 2, kind: input, shape index: {}]
  %s3 = inlined_call_operand.vmem [shape: f32[1,128], index: 3, kind: input, shape index: {}]
  %s4 = inlined_call_operand.hbm [shape: f32[8,128], index: 4, kind: output, shape index: {}]
  %s5 = sld [smem:[#allocation0]]
  $region26: #{linear_with_batch_relu.1} parent=0
    _
  %s7 = ssub.s32 1, %s5
  %s8 = scalar_select 0, %s7, %s5
  $region1: #{linear_with_batch_relu.1} parent=0
    #allocation2 [shape = 'u8[4096]{0}', space=vmem, size = 0x1000, scoped, tag = 'output window, operand 0, single buffered']
    #allocation3 [shape = 's32[1]{0}', space=sflag, size = 0x4, scoped, tag = 'scoped memory for linear_with_batch_relu.1']
    %9 = vsyncpa [#allocation3], 0
    // Predicated region
    $region2: #{linear_with_batch_relu.1} parent=1 // pred_check
      _
    $region3: #{linear_with_batch_relu.1} parent=1 // pred_check_branch
      %11 = sbr.rel (0) target = $region5
    $region4: #{linear_with_batch_relu.1} parent=1 // pred_region
      _
    $region5: #{linear_with_batch_relu.1} parent=1 // pred_fallthru
      _
    // Predicated region
    $region6: #{linear_with_batch_relu.1} parent=1 // pred_check
      _
    $region7: #{linear_with_batch_relu.1} parent=1 // pred_check_branch
      %13 = sbr.rel (0) target = $region9
    $region8: #{linear_with_batch_relu.1} parent=1 // pred_region
      _
    $region9: #{linear_with_batch_relu.1} parent=1 // pred_fallthru
      _
    // Predicated region
    $region10: #{linear_with_batch_relu.1} parent=1 // pred_check
      _
    $region11: #{linear_with_batch_relu.1} parent=1 // pred_check_branch
      %15 = sbr.rel (0) target = $region13
    $region12: #{linear_with_batch_relu.1} parent=1 // pred_region
      _
    $region13: #{linear_with_batch_relu.1} parent=1 // pred_fallthru
      _
    // Predicated region
    $region14: #{linear_with_batch_relu.1} parent=1 // pred_check
      _
    $region15: #{linear_with_batch_relu.1} parent=1 // pred_check_branch
      %17 = sbr.rel (0) target = $region17
    $region16: #{linear_with_batch_relu.1} parent=1 // pred_region
      _
    $region17: #{linear_with_batch_relu.1} parent=1 // pred_fallthru
      _
    %v18 = vld [vmem:[%s0] sm:$0xff]
    %v19 = vld [vmem:[%s1] sm:$0xff]
    %v20 = vld [vmem:[%s1 + $0x8] sm:$0xff]
    %v21 = vld [vmem:[%s1 + $0x10] sm:$0xff]
    %v22 = vld [vmem:[%s1 + $0x18] sm:$0xff]
    %vm23 = vcmask 261120
    %v25 = vsel %vm23, %v18, 0
    %27 = vmatprep.subr.mxu0 0.0
    %28 = vmatpush1.msra.mxu0 0.0
    %29 = vmatprep.subr.mxu0 0.0
    %30 = vmatpush1.msra.mxu0 0.0
    %31 = vmatprep.subr.mxu0 0.0
    %32 = vmatpush1.msra.mxu0 0.0
    %33 = vmatprep.subr.mxu0 0.0
    %34 = vmatpush1.msra.mxu0 0.0
    %35 = vmatprep.subr.mxu0 0.0
    %36 = vmatpush1.msra.mxu0 0.0
    %37 = vmatprep.subr.mxu0 0.0
    %38 = vmatpush1.msra.mxu0 0.0
    %39 = vmatprep.subr.mxu0 0.0
    %40 = vmatpush1.msra.mxu0 0.0
    %41 = vmatprep.subr.mxu0 0.0
    %42 = vmatpush1.msra.mxu0 0.0
    %43 = vmatprep.subr.mxu0 0.0
    %44 = vmatpush1.msra.mxu0 0.0
    %45 = vmatprep.subr.mxu0 0.0
    %46 = vmatpush1.msra.mxu0 0.0
    %47 = vmatprep.subr.mxu0 0.0
    %48 = vmatpush1.msra.mxu0 0.0
    %49 = vmatprep.subr.mxu0 0.0
    %50 = vmatpush1.msra.mxu0 0.0
    %51 = vmatprep.subr.mxu0 0.0
    %52 = vmatpush1.msra.mxu0 %v22
    %53 = vmatprep.subr.mxu0 0.0
    %54 = vmatpush1.msra.mxu0 %v21
    %55 = vmatprep.subr.mxu0 0.0
    %56 = vmatpush1.msra.mxu0 %v20
    %57 = vmatprep.subr.mxu0 0.0
    %58 = vmatpush1.msra.mxu0 %v19
    %59 = vmatprep.subr.mxu0 0.0
    %60 = vmatpush2.msra.mxu0 0.0
    %61 = vmatprep.subr.mxu0 0.0
    %62 = vmatpush2.msra.mxu0 0.0
    %63 = vmatprep.subr.mxu0 0.0
    %64 = vmatpush2.msra.mxu0 0.0
    %65 = vmatprep.subr.mxu0 0.0
    %66 = vmatpush2.msra.mxu0 0.0
    %67 = vmatprep.subr.mxu0 0.0
    %68 = vmatpush2.msra.mxu0 0.0
    %69 = vmatprep.subr.mxu0 0.0
    %70 = vmatpush2.msra.mxu0 0.0
    %71 = vmatprep.subr.mxu0 0.0
    %72 = vmatpush2.msra.mxu0 0.0
    %73 = vmatprep.subr.mxu0 0.0
    %74 = vmatpush2.msra.mxu0 0.0
    %75 = vmatprep.subr.mxu0 0.0
    %76 = vmatpush2.msra.mxu0 0.0
    %77 = vmatprep.subr.mxu0 0.0
    %78 = vmatpush2.msra.mxu0 0.0
    %79 = vmatprep.subr.mxu0 0.0
    %80 = vmatpush2.msra.mxu0 0.0
    %81 = vmatprep.subr.mxu0 0.0
    %82 = vmatpush2.msra.mxu0 0.0
    %83 = vmatprep.subr.mxu0 0.0
    %84 = vmatpush2.msra.mxu0 0.0
    %85 = vmatprep.subr.mxu0 0.0
    %86 = vmatpush2.msra.mxu0 0.0
    %87 = vmatprep.subr.mxu0 0.0
    %88 = vmatpush2.msra.mxu0 0.0
    %89 = vmatprep.subr.mxu0 0.0
    %90 = vmatpush2.msra.mxu0 0.0
    %91 = vmatprep.mubr.f32.mxu0 0.0
    %92 = vmatmul.mubr.f32.gmra.mxu0 %v25
    %v93 = vpop.f32.mrf.mxu0
    %v94 = vadd.f32 0.0, %v93
    %v95 = vpop.f32.mrf.mxu0
    %96 = vdwg.mxu0
    %v97 = vrot.slane %v94, 4
    %v98 = vadd.f32 %v94, %v97
    %v99 = vrot.slane %v98, 2
    %v100 = vadd.f32 %v98, %v99
    %v101 = vrot.slane %v100, 1
    %v102 = vadd.f32 %v100, %v101
    %v103 = vrcp.pop 8.0
    %v104 = vmul.f32 %v102, %v103
    %v105 = vsub.f32 %v94, %v104
    %v106 = vmul.f32 %v105, %v105
    %v107 = vrot.slane %v106, 4
    %v108 = vadd.f32 %v106, %v107
    %v109 = vrot.slane %v108, 2
    %v110 = vadd.f32 %v108, %v109
    %v111 = vrot.slane %v110, 1
    %v112 = vadd.f32 %v110, %v111
    %v113 = vmul.f32 %v112, %v103
    %v114 = vadd.f32 %v113, 1e-05
    %v115 = vrsqrt.pop %v114
    %v116 = vmul.f32 %v105, %v115
    %v117 = vld [vmem:[%s2] sm:$0x1]
    %v119 = vlaneseq
    %v120 = vshrl.u32 %v119, 7
    %v121 = vsub.s32 0, %v120
    %v122 = vrot.slane %v117, %v121
    %v124 = vmul.f32 %v116, %v122
    %v125 = vld [vmem:[%s3] sm:$0x1]
    %v127 = vlaneseq
    %v128 = vshrl.u32 %v127, 7
    %v129 = vsub.s32 0, %v128
    %v130 = vrot.slane %v125, %v129
    %v132 = vadd.f32 %v124, %v130
    %v133 = vmax.f32 %v132, 0.0
    %134 = vst [vmem:[#allocation2] sm:$0xff] %v133
    // Predicated region
    $region18: #{linear_with_batch_relu.1} parent=1 // pred_check
      _
    $region19: #{linear_with_batch_relu.1} parent=1 // pred_check_branch
      %136 = sbr.rel (0) target = $region21
    $region20: #{linear_with_batch_relu.1} parent=1 // pred_region
      %s138 = ssub.s32 128, 128
      %139 = vsyncadd [#allocation3], %s138
      %s141 = sshll.u32 [#allocation2], 4
      %s142 = int_to_ptr.vmem [resolvable:$true] %s141
      %144 = dma.vmem_to_hbm [thread:$0]  %s142, 128, %s4, [#allocation3]
    $region21: #{linear_with_batch_relu.1} parent=1 // pred_fallthru
      _
    // Predicated region
    $region22: #{linear_with_batch_relu.1} parent=1 // pred_check
      _
    $region23: #{linear_with_batch_relu.1} parent=1 // pred_check_branch
      %146 = sbr.rel (0) target = $region25
    $region24: #{linear_with_batch_relu.1} parent=1 // pred_region
      %147 = dma.done [#allocation3], 128
    $region25: #{linear_with_batch_relu.1} parent=1 // pred_fallthru
      _
    %148 = vsyncpa [#allocation3], 1

</llo_original>
